<compile_context>
chip_gen: v5e
topology: v5e:2x2
jax: 0.10.0
libtpu: 0.0.40
codegen_flags: <defaults>
</compile_context>

<pallas_src>
import functools
import math

import jax
import jax.numpy as jnp
from jax.experimental import pallas as pl
from jax.experimental.pallas import tpu as pltpu

# ---- static config (small shapes consistent with the module) ----
B = 2            # batch
SEQ = 8          # sequence length (same for Q and K/V in the test)
HIDDEN = 32      # hidden dim
N_HEADS = 4
HEAD_DIM = HIDDEN // N_HEADS


def _mha_kernel(q_ref, k_ref, v_ref, w_ref, b_ref, o_ref, *,
                batch, seq_q, seq_k, n_heads, head_dim):
    """Fused multi-head attention for the whole (tiny) batch in one invocation.

    w_ref: [D, 3*D]  packed [wq*scale | wk | wv]   (unreplicated)
    b_ref: [1, 3*D]  packed [bq*scale | bk | bv]
    """
    D = n_heads * head_dim
    nq = batch * seq_q
    nk = batch * seq_k

    # --- fused Q/K/V projection: ONE [nq+2*nk, D] x [D, 3D] MXU matmul ------
    x = jnp.concatenate(
        [q_ref[...].reshape(nq, D),
         k_ref[...].reshape(nk, D),
         v_ref[...].reshape(nk, D)], axis=0)                          # [nq+2nk, D]
    proj = jnp.dot(x, w_ref[...],
                   preferred_element_type=jnp.float32) + b_ref[...]   # [nq+2nk, 3D]
    # Each row block only reads its own 32-lane column block, so the shared
    # [1, 3D] bias add is correct for all three projections.
    q = proj[:nq, 0:D].reshape(batch, seq_q, D)            # scale already folded in
    k = proj[nq:nq + nk, D:2 * D].reshape(batch, seq_k, D)
    v = proj[nq + nk:, 2 * D:3 * D].reshape(batch, seq_k, D)

    # --- per-head attention via lane masks; outputs land head-in-lanes ------
    # TODO(synk): optional attention_mask (module default None) is not applied.
    lane = jax.lax.broadcasted_iota(jnp.int32, (1, 1, D), 2)
    out = jnp.zeros((batch, seq_q, D), jnp.float32)
    for h in range(n_heads):
        lo = h * head_dim
        mask = ((lane >= lo) & (lane < lo + head_dim)).astype(jnp.float32)
        kh = k * mask                      # zero other heads' lanes -> correct contraction
        vh = v * mask
        s = jnp.einsum("bqd,bkd->bqk", q, kh,
                       preferred_element_type=jnp.float32)            # [B, Sq, Sk]
        m = jnp.max(s, axis=-1, keepdims=True)
        e = jnp.exp(s - m)
        p = e / jnp.sum(e, axis=-1, keepdims=True)                    # exact normalisation
        # nonzero only in head-h lanes, so accumulation assembles the full output
        out = out + jnp.einsum("bqk,bkd->bqd", p, vh,
                               preferred_element_type=jnp.float32)    # [B, Sq, D]

    o_ref[...] = out                        # single lane-dense full-block store


def pack_params(params, n_heads=N_HEADS):
    """Host-side packing — call ONCE, outside the per-call path.

    Packs the 6 projection params into one [D, 3D] weight and one [1, 3D] bias,
    folding the 1/sqrt(head_dim) attention scale into the query projection.
    """
    D = params["wq"].shape[0]
    scale = 1.0 / math.sqrt(D // n_heads)
    w_packed = jnp.concatenate(
        [params["wq"] * scale, params["wk"], params["wv"]], axis=1)   # [D, 3D]
    b_packed = jnp.concatenate(
        [params["bq"] * scale, params["bk"], params["bv"]]).reshape(1, 3 * D)
    return w_packed, b_packed


def multihead_attention(Q, K, V, w_packed, b_packed):
    """Q: [B, Sq, D], K/V: [B, Sk, D] -> [B, Sq, D] (module layout, no transposes)."""
    Bn, Sq, D = Q.shape
    Sk = K.shape[1]
    assert K.shape == (Bn, Sk, D) and V.shape == (Bn, Sk, D)
    H = N_HEADS
    hd = D // H
    assert w_packed.shape == (D, 3 * D) and b_packed.shape == (1, 3 * D)

    kernel = functools.partial(_mha_kernel, batch=Bn, seq_q=Sq, seq_k=Sk,
                               n_heads=H, head_dim=hd)

    def full(shape):
        return pl.BlockSpec(shape, lambda i: (0,) * len(shape))

    return pl.pallas_call(
        kernel,
        out_shape=jax.ShapeDtypeStruct((Bn, Sq, D), jnp.float32),
        grid=(1,),   # single invocation: everything staged once, no per-step overhead
        in_specs=[
            full((Bn, Sq, D)),       # Q
            full((Bn, Sk, D)),       # K
            full((Bn, Sk, D)),       # V
            full((D, 3 * D)),        # packed projection weights (unreplicated)
            full((1, 3 * D)),        # packed biases
        ],
        out_specs=full((Bn, Sq, D)),
        compiler_params=pltpu.CompilerParams(dimension_semantics=("arbitrary",)),
    )(Q, K, V, w_packed, b_packed)


def reference(Q, K, V, params):
    """Pure-JAX mirror of the PyTorch Multiheadattention.forward (attention_mask=None)."""
    def transform(x, w, b):
        bs, seq, _ = x.shape
        proj = x @ w + b
        return proj.reshape(bs, seq, N_HEADS, HEAD_DIM).transpose(0, 2, 1, 3)

    q = transform(Q, params["wq"], params["bq"])
    k = transform(K, params["wk"], params["bk"])
    v = transform(V, params["wv"], params["bv"])
    score = jnp.einsum("bnqd,bnkd->bnqk", q, k) / math.sqrt(HEAD_DIM)
    score = jax.nn.softmax(score, axis=-1)
    vv = jnp.einsum("bnlk,bnql->bqnk", v, score)
    return vv.reshape(Q.shape[0], Q.shape[1], N_HEADS * HEAD_DIM)


def make_params(key):
    ks = jax.random.split(key, 6)
    D = HIDDEN
    f32 = jnp.float32
    return {
        # nn.Linear weights stored pre-transposed ([in, out]) so we compute x @ W + b
        "wq": 0.05 * jax.random.normal(ks[0], (D, D), f32),
        "bq": 0.05 * jax.random.normal(ks[1], (D,), f32),
        "wk": 0.05 * jax.random.normal(ks[2], (D, D), f32),
        "bk": 0.05 * jax.random.normal(ks[3], (D,), f32),
        "wv": 0.05 * jax.random.normal(ks[4], (D, D), f32),
        "bv": 0.05 * jax.random.normal(ks[5], (D,), f32),
    }


if __name__ == "__main__":
    key = jax.random.PRNGKey(0)
    kq, kk, kv, kp = jax.random.split(key, 4)

    Q = jax.random.normal(kq, (B, SEQ, HIDDEN), jnp.float32)
    K = jax.random.normal(kk, (B, SEQ, HIDDEN), jnp.float32)
    V = jax.random.normal(kv, (B, SEQ, HIDDEN), jnp.float32)
    params = make_params(kp)

    # Packing hoisted out of the per-call path (would be done once per model load).
    w_packed, b_packed = pack_params(params)

    out = multihead_attention(Q, K, V, w_packed, b_packed)
    out = jax.block_until_ready(out)

    ref = reference(Q, K, V, params)
    assert out.shape == (B, SEQ, HIDDEN), out.shape
    max_err = float(jnp.max(jnp.abs(out - ref)))
    assert jnp.allclose(out, ref, rtol=1e-4, atol=1e-4), max_err

    print("KERNEL_OK")
</pallas_src>

<mosaic_0001>
module attributes {stable_mosaic.version = 11 : i64} {
  func.func @_mha_kernel(%arg0: i32, %arg1: memref<2x8x32xf32, #tpu.memory_space<vmem>>, %arg2: memref<2x8x32xf32, #tpu.memory_space<vmem>>, %arg3: memref<2x8x32xf32, #tpu.memory_space<vmem>>, %arg4: memref<32x96xf32, #tpu.memory_space<vmem>>, %arg5: memref<1x96xf32, #tpu.memory_space<vmem>>, %arg6: memref<2x8x32xf32, #tpu.memory_space<vmem>>) attributes {dimension_semantics = [#tpu.dimension_semantics<arbitrary>], iteration_bounds = array<i64: 1>, scalar_prefetch = 0 : i64, scratch_operands = 0 : i64, tpu.core_type = #tpu.core_type<tc>, window_params = [{pipeline_mode = #tpu.pipeline_mode<synchronous>, transform_indices = @transform_0, window_bounds = array<i64: 2, 8, 32>}, {pipeline_mode = #tpu.pipeline_mode<synchronous>, transform_indices = @transform_1, window_bounds = array<i64: 2, 8, 32>}, {pipeline_mode = #tpu.pipeline_mode<synchronous>, transform_indices = @transform_2, window_bounds = array<i64: 2, 8, 32>}, {pipeline_mode = #tpu.pipeline_mode<synchronous>, transform_indices = @transform_3, window_bounds = array<i64: 32, 96>}, {pipeline_mode = #tpu.pipeline_mode<synchronous>, transform_indices = @transform_4, window_bounds = array<i64: 1, 96>}, {pipeline_mode = #tpu.pipeline_mode<synchronous>, transform_indices = @transform_5, window_bounds = array<i64: 2, 8, 32>}]} {
    %c0 = arith.constant 0 : index
    %c0_0 = arith.constant 0 : index
    %c0_1 = arith.constant 0 : index
    %0 = vector.load %arg1[%c0, %c0_0, %c0_1] : memref<2x8x32xf32, #tpu.memory_space<vmem>>, vector<2x8x32xf32>
    %1 = vector.shape_cast %0 : vector<2x8x32xf32> to vector<16x32xf32>
    %c0_2 = arith.constant 0 : index
    %c0_3 = arith.constant 0 : index
    %c0_4 = arith.constant 0 : index
    %2 = vector.load %arg2[%c0_2, %c0_3, %c0_4] : memref<2x8x32xf32, #tpu.memory_space<vmem>>, vector<2x8x32xf32>
    %3 = vector.shape_cast %2 : vector<2x8x32xf32> to vector<16x32xf32>
    %c0_5 = arith.constant 0 : index
    %c0_6 = arith.constant 0 : index
    %c0_7 = arith.constant 0 : index
    %4 = vector.load %arg3[%c0_5, %c0_6, %c0_7] : memref<2x8x32xf32, #tpu.memory_space<vmem>>, vector<2x8x32xf32>
    %5 = vector.shape_cast %4 : vector<2x8x32xf32> to vector<16x32xf32>
    %6 = tpu.concatenate %1, %3, %5 in 0 : vector<16x32xf32>, vector<16x32xf32>, vector<16x32xf32> -> vector<48x32xf32>
    %c0_8 = arith.constant 0 : index
    %c0_9 = arith.constant 0 : index
    %7 = vector.load %arg4[%c0_8, %c0_9] : memref<32x96xf32, #tpu.memory_space<vmem>>, vector<32x96xf32>
    %cst = arith.constant dense<0.000000e+00> : vector<48x96xf32>
    %8 = tpu.matmul %6, %7, %cst {dimension_numbers = #tpu.dot_dimension_numbers<[1], [0], [0], [1], [0, 0, 1, 1], [], []>} : vector<48x32xf32>, vector<32x96xf32>, vector<48x96xf32> -> vector<48x96xf32>
    %c0_10 = arith.constant 0 : index
    %c0_11 = arith.constant 0 : index
    %9 = vector.load %arg5[%c0_10, %c0_11] : memref<1x96xf32, #tpu.memory_space<vmem>>, vector<1x96xf32>
    %10 = vector.broadcast %9 : vector<1x96xf32> to vector<48x96xf32>
    %11 = arith.addf %8, %10 : vector<48x96xf32>
    %12 = vector.extract_strided_slice %11 {offsets = [0, 0], sizes = [16, 32], strides = [1, 1]} : vector<48x96xf32> to vector<16x32xf32>
    %13 = vector.shape_cast %12 : vector<16x32xf32> to vector<2x8x32xf32>
    %14 = vector.extract_strided_slice %11 {offsets = [16, 32], sizes = [16, 32], strides = [1, 1]} : vector<48x96xf32> to vector<16x32xf32>
    %15 = vector.shape_cast %14 : vector<16x32xf32> to vector<2x8x32xf32>
    %16 = vector.extract_strided_slice %11 {offsets = [32, 64], sizes = [16, 32], strides = [1, 1]} : vector<48x96xf32> to vector<16x32xf32>
    %17 = vector.shape_cast %16 : vector<16x32xf32> to vector<2x8x32xf32>
    %18 = tpu.iota {dimensions = array<i32: 2>} : vector<1x1x32xi32>
    %cst_12 = arith.constant 0.000000e+00 : f32
    %19 = vector.broadcast %cst_12 : f32 to vector<2x8x32xf32>
    %c0_i32 = arith.constant 0 : i32
    %20 = vector.broadcast %c0_i32 : i32 to vector<1x1x32xi32>
    %21 = arith.cmpi sge, %18, %20 : vector<1x1x32xi32>
    %c8_i32 = arith.constant 8 : i32
    %22 = vector.broadcast %c8_i32 : i32 to vector<1x1x32xi32>
    %23 = arith.cmpi slt, %18, %22 : vector<1x1x32xi32>
    %24 = arith.andi %21, %23 : vector<1x1x32xi1>
    %25 = arith.extui %24 : vector<1x1x32xi1> to vector<1x1x32xi32>
    %26 = arith.sitofp %25 : vector<1x1x32xi32> to vector<1x1x32xf32>
    %27 = vector.broadcast %26 : vector<1x1x32xf32> to vector<2x8x32xf32>
    %28 = arith.mulf %15, %27 : vector<2x8x32xf32>
    %29 = vector.broadcast %26 : vector<1x1x32xf32> to vector<2x8x32xf32>
    %30 = arith.mulf %17, %29 : vector<2x8x32xf32>
    "tpu.trace_start"() <{level = 10 : i32, message = "bqd,bkd->bqk"}> : () -> ()
    %cst_13 = arith.constant dense<0.000000e+00> : vector<2x8x8xf32>
    %31 = tpu.matmul %13, %28, %cst_13 {dimension_numbers = #tpu.dot_dimension_numbers<[2], [2], [1], [1], [0, 0, 0, 1, 1, 1], [0], [0]>} : vector<2x8x32xf32>, vector<2x8x32xf32>, vector<2x8x8xf32> -> vector<2x8x8xf32>
    "tpu.trace_stop"() : () -> ()
    %cst_14 = arith.constant dense<0xFF800000> : vector<2x8xf32>
    %32 = vector.multi_reduction <maximumf>, %31, %cst_14 [2] : vector<2x8x8xf32> to vector<2x8xf32>
    %33 = vector.shape_cast %32 : vector<2x8xf32> to vector<2x8x1xf32>
    %34 = vector.broadcast %33 : vector<2x8x1xf32> to vector<2x8x8xf32>
    %35 = arith.subf %31, %34 : vector<2x8x8xf32>
    %36 = math.exp %35 : vector<2x8x8xf32>
    %cst_15 = arith.constant dense<0.000000e+00> : vector<2x8xf32>
    %37 = vector.multi_reduction <add>, %36, %cst_15 [2] : vector<2x8x8xf32> to vector<2x8xf32>
    %38 = vector.shape_cast %37 : vector<2x8xf32> to vector<2x8x1xf32>
    %39 = vector.broadcast %38 : vector<2x8x1xf32> to vector<2x8x8xf32>
    %40 = arith.divf %36, %39 : vector<2x8x8xf32>
    "tpu.trace_start"() <{level = 10 : i32, message = "bqk,bkd->bqd"}> : () -> ()
    %cst_16 = arith.constant dense<0.000000e+00> : vector<2x8x32xf32>
    %41 = tpu.matmul %40, %30, %cst_16 {dimension_numbers = #tpu.dot_dimension_numbers<[2], [1], [1], [2], [0, 0, 0, 1, 1, 2], [0], [0]>} : vector<2x8x8xf32>, vector<2x8x32xf32>, vector<2x8x32xf32> -> vector<2x8x32xf32>
    "tpu.trace_stop"() : () -> ()
    %42 = arith.addf %19, %41 : vector<2x8x32xf32>
    %c8_i32_17 = arith.constant 8 : i32
    %43 = vector.broadcast %c8_i32_17 : i32 to vector<1x1x32xi32>
    %44 = arith.cmpi sge, %18, %43 : vector<1x1x32xi32>
    %c16_i32 = arith.constant 16 : i32
    %45 = vector.broadcast %c16_i32 : i32 to vector<1x1x32xi32>
    %46 = arith.cmpi slt, %18, %45 : vector<1x1x32xi32>
    %47 = arith.andi %44, %46 : vector<1x1x32xi1>
    %48 = arith.extui %47 : vector<1x1x32xi1> to vector<1x1x32xi32>
    %49 = arith.sitofp %48 : vector<1x1x32xi32> to vector<1x1x32xf32>
    %50 = vector.broadcast %49 : vector<1x1x32xf32> to vector<2x8x32xf32>
    %51 = arith.mulf %15, %50 : vector<2x8x32xf32>
    %52 = vector.broadcast %49 : vector<1x1x32xf32> to vector<2x8x32xf32>
    %53 = arith.mulf %17, %52 : vector<2x8x32xf32>
    "tpu.trace_start"() <{level = 10 : i32, message = "bqd,bkd->bqk"}> : () -> ()
    %cst_18 = arith.constant dense<0.000000e+00> : vector<2x8x8xf32>
    %54 = tpu.matmul %13, %51, %cst_18 {dimension_numbers = #tpu.dot_dimension_numbers<[2], [2], [1], [1], [0, 0, 0, 1, 1, 1], [0], [0]>} : vector<2x8x32xf32>, vector<2x8x32xf32>, vector<2x8x8xf32> -> vector<2x8x8xf32>
    "tpu.trace_stop"() : () -> ()
    %cst_19 = arith.constant dense<0xFF800000> : vector<2x8xf32>
    %55 = vector.multi_reduction <maximumf>, %54, %cst_19 [2] : vector<2x8x8xf32> to vector<2x8xf32>
    %56 = vector.shape_cast %55 : vector<2x8xf32> to vector<2x8x1xf32>
    %57 = vector.broadcast %56 : vector<2x8x1xf32> to vector<2x8x8xf32>
    %58 = arith.subf %54, %57 : vector<2x8x8xf32>
    %59 = math.exp %58 : vector<2x8x8xf32>
    %cst_20 = arith.constant dense<0.000000e+00> : vector<2x8xf32>
    %60 = vector.multi_reduction <add>, %59, %cst_20 [2] : vector<2x8x8xf32> to vector<2x8xf32>
    %61 = vector.shape_cast %60 : vector<2x8xf32> to vector<2x8x1xf32>
    %62 = vector.broadcast %61 : vector<2x8x1xf32> to vector<2x8x8xf32>
    %63 = arith.divf %59, %62 : vector<2x8x8xf32>
    "tpu.trace_start"() <{level = 10 : i32, message = "bqk,bkd->bqd"}> : () -> ()
    %cst_21 = arith.constant dense<0.000000e+00> : vector<2x8x32xf32>
    %64 = tpu.matmul %63, %53, %cst_21 {dimension_numbers = #tpu.dot_dimension_numbers<[2], [1], [1], [2], [0, 0, 0, 1, 1, 2], [0], [0]>} : vector<2x8x8xf32>, vector<2x8x32xf32>, vector<2x8x32xf32> -> vector<2x8x32xf32>
    "tpu.trace_stop"() : () -> ()
    %65 = arith.addf %42, %64 : vector<2x8x32xf32>
    %c16_i32_22 = arith.constant 16 : i32
    %66 = vector.broadcast %c16_i32_22 : i32 to vector<1x1x32xi32>
    %67 = arith.cmpi sge, %18, %66 : vector<1x1x32xi32>
    %c24_i32 = arith.constant 24 : i32
    %68 = vector.broadcast %c24_i32 : i32 to vector<1x1x32xi32>
    %69 = arith.cmpi slt, %18, %68 : vector<1x1x32xi32>
    %70 = arith.andi %67, %69 : vector<1x1x32xi1>
    %71 = arith.extui %70 : vector<1x1x32xi1> to vector<1x1x32xi32>
    %72 = arith.sitofp %71 : vector<1x1x32xi32> to vector<1x1x32xf32>
    %73 = vector.broadcast %72 : vector<1x1x32xf32> to vector<2x8x32xf32>
    %74 = arith.mulf %15, %73 : vector<2x8x32xf32>
    %75 = vector.broadcast %72 : vector<1x1x32xf32> to vector<2x8x32xf32>
    %76 = arith.mulf %17, %75 : vector<2x8x32xf32>
    "tpu.trace_start"() <{level = 10 : i32, message = "bqd,bkd->bqk"}> : () -> ()
    %cst_23 = arith.constant dense<0.000000e+00> : vector<2x8x8xf32>
    %77 = tpu.matmul %13, %74, %cst_23 {dimension_numbers = #tpu.dot_dimension_numbers<[2], [2], [1], [1], [0, 0, 0, 1, 1, 1], [0], [0]>} : vector<2x8x32xf32>, vector<2x8x32xf32>, vector<2x8x8xf32> -> vector<2x8x8xf32>
    "tpu.trace_stop"() : () -> ()
    %cst_24 = arith.constant dense<0xFF800000> : vector<2x8xf32>
    %78 = vector.multi_reduction <maximumf>, %77, %cst_24 [2] : vector<2x8x8xf32> to vector<2x8xf32>
    %79 = vector.shape_cast %78 : vector<2x8xf32> to vector<2x8x1xf32>
    %80 = vector.broadcast %79 : vector<2x8x1xf32> to vector<2x8x8xf32>
    %81 = arith.subf %77, %80 : vector<2x8x8xf32>
    %82 = math.exp %81 : vector<2x8x8xf32>
    %cst_25 = arith.constant dense<0.000000e+00> : vector<2x8xf32>
    %83 = vector.multi_reduction <add>, %82, %cst_25 [2] : vector<2x8x8xf32> to vector<2x8xf32>
    %84 = vector.shape_cast %83 : vector<2x8xf32> to vector<2x8x1xf32>
    %85 = vector.broadcast %84 : vector<2x8x1xf32> to vector<2x8x8xf32>
    %86 = arith.divf %82, %85 : vector<2x8x8xf32>
    "tpu.trace_start"() <{level = 10 : i32, message = "bqk,bkd->bqd"}> : () -> ()
    %cst_26 = arith.constant dense<0.000000e+00> : vector<2x8x32xf32>
    %87 = tpu.matmul %86, %76, %cst_26 {dimension_numbers = #tpu.dot_dimension_numbers<[2], [1], [1], [2], [0, 0, 0, 1, 1, 2], [0], [0]>} : vector<2x8x8xf32>, vector<2x8x32xf32>, vector<2x8x32xf32> -> vector<2x8x32xf32>
    "tpu.trace_stop"() : () -> ()
    %88 = arith.addf %65, %87 : vector<2x8x32xf32>
    %c24_i32_27 = arith.constant 24 : i32
    %89 = vector.broadcast %c24_i32_27 : i32 to vector<1x1x32xi32>
    %90 = arith.cmpi sge, %18, %89 : vector<1x1x32xi32>
    %c32_i32 = arith.constant 32 : i32
    %91 = vector.broadcast %c32_i32 : i32 to vector<1x1x32xi32>
    %92 = arith.cmpi slt, %18, %91 : vector<1x1x32xi32>
    %93 = arith.andi %90, %92 : vector<1x1x32xi1>
    %94 = arith.extui %93 : vector<1x1x32xi1> to vector<1x1x32xi32>
    %95 = arith.sitofp %94 : vector<1x1x32xi32> to vector<1x1x32xf32>
    %96 = vector.broadcast %95 : vector<1x1x32xf32> to vector<2x8x32xf32>
    %97 = arith.mulf %15, %96 : vector<2x8x32xf32>
    %98 = vector.broadcast %95 : vector<1x1x32xf32> to vector<2x8x32xf32>
    %99 = arith.mulf %17, %98 : vector<2x8x32xf32>
    "tpu.trace_start"() <{level = 10 : i32, message = "bqd,bkd->bqk"}> : () -> ()
    %cst_28 = arith.constant dense<0.000000e+00> : vector<2x8x8xf32>
    %100 = tpu.matmul %13, %97, %cst_28 {dimension_numbers = #tpu.dot_dimension_numbers<[2], [2], [1], [1], [0, 0, 0, 1, 1, 1], [0], [0]>} : vector<2x8x32xf32>, vector<2x8x32xf32>, vector<2x8x8xf32> -> vector<2x8x8xf32>
    "tpu.trace_stop"() : () -> ()
    %cst_29 = arith.constant dense<0xFF800000> : vector<2x8xf32>
    %101 = vector.multi_reduction <maximumf>, %100, %cst_29 [2] : vector<2x8x8xf32> to vector<2x8xf32>
    %102 = vector.shape_cast %101 : vector<2x8xf32> to vector<2x8x1xf32>
    %103 = vector.broadcast %102 : vector<2x8x1xf32> to vector<2x8x8xf32>
    %104 = arith.subf %100, %103 : vector<2x8x8xf32>
    %105 = math.exp %104 : vector<2x8x8xf32>
    %cst_30 = arith.constant dense<0.000000e+00> : vector<2x8xf32>
    %106 = vector.multi_reduction <add>, %105, %cst_30 [2] : vector<2x8x8xf32> to vector<2x8xf32>
    %107 = vector.shape_cast %106 : vector<2x8xf32> to vector<2x8x1xf32>
    %108 = vector.broadcast %107 : vector<2x8x1xf32> to vector<2x8x8xf32>
    %109 = arith.divf %105, %108 : vector<2x8x8xf32>
    "tpu.trace_start"() <{level = 10 : i32, message = "bqk,bkd->bqd"}> : () -> ()
    %cst_31 = arith.constant dense<0.000000e+00> : vector<2x8x32xf32>
    %110 = tpu.matmul %109, %99, %cst_31 {dimension_numbers = #tpu.dot_dimension_numbers<[2], [1], [1], [2], [0, 0, 0, 1, 1, 2], [0], [0]>} : vector<2x8x8xf32>, vector<2x8x32xf32>, vector<2x8x32xf32> -> vector<2x8x32xf32>
    "tpu.trace_stop"() : () -> ()
    %111 = arith.addf %88, %110 : vector<2x8x32xf32>
    %c0_32 = arith.constant 0 : index
    %c0_33 = arith.constant 0 : index
    %c0_34 = arith.constant 0 : index
    %112 = vector.load %arg6[%c0_32, %c0_33, %c0_34] : memref<2x8x32xf32, #tpu.memory_space<vmem>>, vector<2x8x32xf32>
    tpu.vector_store %arg6[%c0_32, %c0_33, %c0_34], %111 {strides = array<i32>} : memref<2x8x32xf32, #tpu.memory_space<vmem>>, vector<2x8x32xf32>,
    return
  }
  func.func @transform_0(%arg0: i32) -> (i32, i32, i32) {
    %c0_i32 = arith.constant 0 : i32
    %c0_i32_0 = arith.constant 0 : i32
    %c0_i32_1 = arith.constant 0 : i32
    %c0_i32_2 = arith.constant 0 : i32
    return %c0_i32, %c0_i32_0, %c0_i32_1 : i32, i32, i32
  }
  func.func @transform_1(%arg0: i32) -> (i32, i32, i32) {
    %c0_i32 = arith.constant 0 : i32
    %c0_i32_0 = arith.constant 0 : i32
    %c0_i32_1 = arith.constant 0 : i32
    %c0_i32_2 = arith.constant 0 : i32
    return %c0_i32, %c0_i32_0, %c0_i32_1 : i32, i32, i32
  }
  func.func @transform_2(%arg0: i32) -> (i32, i32, i32) {
    %c0_i32 = arith.constant 0 : i32
    %c0_i32_0 = arith.constant 0 : i32
    %c0_i32_1 = arith.constant 0 : i32
    %c0_i32_2 = arith.constant 0 : i32
    return %c0_i32, %c0_i32_0, %c0_i32_1 : i32, i32, i32
  }
  func.func @transform_3(%arg0: i32) -> (i32, i32) {
    %c0_i32 = arith.constant 0 : i32
    %c0_i32_0 = arith.constant 0 : i32
    %c0_i32_1 = arith.constant 0 : i32
    return %c0_i32, %c0_i32_0 : i32, i32
  }
  func.func @transform_4(%arg0: i32) -> (i32, i32) {
    %c0_i32 = arith.constant 0 : i32
    %c0_i32_0 = arith.constant 0 : i32
    %c0_i32_1 = arith.constant 0 : i32
    return %c0_i32, %c0_i32_0 : i32, i32
  }
  func.func @transform_5(%arg0: i32) -> (i32, i32, i32) {
    %c0_i32 = arith.constant 0 : i32
    %c0_i32_0 = arith.constant 0 : i32
    %c0_i32_1 = arith.constant 0 : i32
    %c0_i32_2 = arith.constant 0 : i32
    return %c0_i32, %c0_i32_0, %c0_i32_1 : i32, i32, i32
  }
}

</mosaic_0001>

<llo_original>
// kernel: tpu_custom_call.1
$region0: #{tpu_custom_call.1}
  #allocation0 [shape = 'u32[]', space=smem, size = 0x4, offset = 0x4, fixed_abs, tag = 'smem constant byte address 0x4 - core index']
  #allocation1 [shape = 'u32[72,128]{1,0:T(1,128)}', space=vmem, size = 0x9000, scoped, tag = 'internal scratch']
  %s0 = inlined_call_operand.hbm [shape: f32[2,8,32], index: 0, kind: input, shape index: {}]
  %s1 = inlined_call_operand.hbm [shape: f32[2,8,32], index: 1, kind: input, shape index: {}]
  %s2 = inlined_call_operand.hbm [shape: f32[2,8,32], index: 2, kind: input, shape index: {}]
  %s3 = inlined_call_operand.hbm [shape: f32[32,96], index: 3, kind: input, shape index: {}]
  %s4 = inlined_call_operand.vmem [shape: f32[1,96], index: 4, kind: input, shape index: {}]
  %s5 = inlined_call_operand.hbm [shape: f32[2,8,32], index: 5, kind: output, shape index: {}]
  %s6 = sld [smem:[#allocation0]]
  $region46: #{tpu_custom_call.1} parent=0
    _
  %s8 = ssub.s32 1, %s6
  %s9 = scalar_select 0, %s8, %s6
  $region1: #{tpu_custom_call.1} parent=0
    #allocation2 [shape = 'u8[8192]{0}', space=vmem, size = 0x2000, scoped, tag = 'input window, operand 0, single buffered']
    #allocation3 [shape = 's32[1]{0}', space=sflag, size = 0x4, scoped, tag = 'scoped memory for tpu_custom_call.1']
    #allocation4 [shape = 's32[1]{0}', space=sflag, size = 0x4, scoped, tag = 'scoped memory for tpu_custom_call.1']
    #allocation5 [shape = 'u8[8192]{0}', space=vmem, size = 0x2000, scoped, tag = 'input window, operand 1, single buffered']
    #allocation6 [shape = 's32[1]{0}', space=sflag, size = 0x4, scoped, tag = 'scoped memory for tpu_custom_call.1']
    #allocation7 [shape = 'u8[8192]{0}', space=vmem, size = 0x2000, scoped, tag = 'input window, operand 2, single buffered']
    #allocation8 [shape = 'u8[16384]{0}', space=vmem, size = 0x4000, scoped, tag = 'input window, operand 3, single buffered']
    #allocation9 [shape = 's32[1]{0}', space=sflag, size = 0x4, scoped, tag = 'scoped memory for tpu_custom_call.1']
    #allocation10 [shape = 'u8[8192]{0}', space=vmem, size = 0x2000, scoped, tag = 'output window, operand 0, single buffered']
    %10 = vsyncpa [#allocation3], 0
    %11 = vsyncpa [#allocation6], 0
    %12 = vsyncpa [#allocation9], 0
    %13 = vsyncpa [#allocation4], 0
    // Predicated region
    $region2: #{tpu_custom_call.1} parent=1 // pred_check
      _
    $region3: #{tpu_custom_call.1} parent=1 // pred_check_branch
      %15 = sbr.rel (0) target = $region5
    $region4: #{tpu_custom_call.1} parent=1 // pred_region
      %17 = vsyncadd [#allocation3], 0
      %s18 = sshll.u32 %s0, 4
      %s19 = int_to_ptr.hbm [resolvable:$true] %s18
      %s20 = sshll.u32 [#allocation2], 4
      %s21 = int_to_ptr.vmem [resolvable:$true] %s20
      %26 = dma.hbm_to_vmem [thread:$0]  %s19, 256, %s21, [#allocation3], 128, 128, 8
    $region5: #{tpu_custom_call.1} parent=1 // pred_fallthru
      _
    // Predicated region
    $region6: #{tpu_custom_call.1} parent=1 // pred_check
      _
    $region7: #{tpu_custom_call.1} parent=1 // pred_check_branch
      %28 = sbr.rel (0) target = $region9
    $region8: #{tpu_custom_call.1} parent=1 // pred_region
      %30 = vsyncadd [#allocation6], 0
      %s31 = sshll.u32 %s1, 4
      %s32 = int_to_ptr.hbm [resolvable:$true] %s31
      %s33 = sshll.u32 [#allocation5], 4
      %s34 = int_to_ptr.vmem [resolvable:$true] %s33
      %39 = dma.hbm_to_vmem [thread:$0]  %s32, 256, %s34, [#allocation6], 128, 128, 8
    $region9: #{tpu_custom_call.1} parent=1 // pred_fallthru
      _
    // Predicated region
    $region10: #{tpu_custom_call.1} parent=1 // pred_check
      _
    $region11: #{tpu_custom_call.1} parent=1 // pred_check_branch
      %41 = sbr.rel (0) target = $region13
    $region12: #{tpu_custom_call.1} parent=1 // pred_region
      %43 = vsyncadd [#allocation6], 0
      %s44 = sshll.u32 %s2, 4
      %s45 = int_to_ptr.hbm [resolvable:$true] %s44
      %s46 = sshll.u32 [#allocation7], 4
      %s47 = int_to_ptr.vmem [resolvable:$true] %s46
      %52 = dma.hbm_to_vmem [thread:$0]  %s45, 256, %s47, [#allocation6], 128, 128, 8
    $region13: #{tpu_custom_call.1} parent=1 // pred_fallthru
      _
    // Predicated region
    $region14: #{tpu_custom_call.1} parent=1 // pred_check
      _
    $region15: #{tpu_custom_call.1} parent=1 // pred_check_branch
      %54 = sbr.rel (0) target = $region17
    $region16: #{tpu_custom_call.1} parent=1 // pred_region
      %56 = vsyncadd [#allocation9], 0
      %s57 = sshll.u32 %s3, 4
      %s58 = int_to_ptr.hbm [resolvable:$true] %s57
      %s59 = sshll.u32 [#allocation8], 4
      %s60 = int_to_ptr.vmem [resolvable:$true] %s59
      %65 = dma.hbm_to_vmem [thread:$0]  %s58, 512, %s60, [#allocation9], 128, 128, 8
    $region17: #{tpu_custom_call.1} parent=1 // pred_fallthru
      _
    // Predicated region
    $region18: #{tpu_custom_call.1} parent=1 // pred_check
      _
    $region19: #{tpu_custom_call.1} parent=1 // pred_check_branch
      %67 = sbr.rel (0) target = $region21
    $region20: #{tpu_custom_call.1} parent=1 // pred_region
      _
    $region21: #{tpu_custom_call.1} parent=1 // pred_fallthru
      _
    // Predicated region
    $region22: #{tpu_custom_call.1} parent=1 // pred_check
      _
    $region23: #{tpu_custom_call.1} parent=1 // pred_check_branch
      %69 = sbr.rel (0) target = $region25
    $region24: #{tpu_custom_call.1} parent=1 // pred_region
      %71 = dma.done [#allocation3], 256
    $region25: #{tpu_custom_call.1} parent=1 // pred_fallthru
      _
    // Predicated region
    $region26: #{tpu_custom_call.1} parent=1 // pred_check
      _
    $region27: #{tpu_custom_call.1} parent=1 // pred_check_branch
      %73 = sbr.rel (0) target = $region29
    $region28: #{tpu_custom_call.1} parent=1 // pred_region
      %75 = dma.done [#allocation6], 256
    $region29: #{tpu_custom_call.1} parent=1 // pred_fallthru
      _
    // Predicated region
    $region30: #{tpu_custom_call.1} parent=1 // pred_check
      _
    $region31: #{tpu_custom_call.1} parent=1 // pred_check_branch
      %77 = sbr.rel (0) target = $region33
    $region32: #{tpu_custom_call.1} parent=1 // pred_region
      %79 = dma.done [#allocation6], 256
    $region33: #{tpu_custom_call.1} parent=1 // pred_fallthru
      _
    // Predicated region
    $region34: #{tpu_custom_call.1} parent=1 // pred_check
      _
    $region35: #{tpu_custom_call.1} parent=1 // pred_check_branch
      %81 = sbr.rel (0) target = $region37
    $region36: #{tpu_custom_call.1} parent=1 // pred_region
      %83 = dma.done [#allocation9], 512
    $region37: #{tpu_custom_call.1} parent=1 // pred_fallthru
      _
    %v84 = vld [vmem:[#allocation2] sm:$0xff]
    %v85 = vld [vmem:[#allocation2 + $0x8] sm:$0xff]
    %v86 = vld [vmem:[#allocation5] sm:$0xff]
    %v87 = vld [vmem:[#allocation5 + $0x8] sm:$0xff]
    %v88 = vld [vmem:[#allocation7] sm:$0xff]
    %v89 = vld [vmem:[#allocation7 + $0x8] sm:$0xff]
    %v90 = vld [vmem:[#allocation8] sm:$0xff]
    %v91 = vld [vmem:[#allocation8 + $0x8] sm:$0xff]
    %v92 = vld [vmem:[#allocation8 + $0x10] sm:$0xff]
    %v93 = vld [vmem:[#allocation8 + $0x18] sm:$0xff]
    %v94 = vld [vmem:[%s4] sm:$0x1]
    %v96 = vperm.slane %v94, 0
    %vm98 = vcmask 261120
    %v100 = vsel %vm98, %v84, 0
    %v103 = vsel %vm98, %v85, 0
    %v106 = vsel %vm98, %v86, 0
    %v109 = vsel %vm98, %v87, 0
    %v112 = vsel %vm98, %v88, 0
    %v115 = vsel %vm98, %v89, 0
    %117 = vmatpush.msra.mxu0 0.0
    %118 = vmatpush.msra.mxu0 0.0
    %119 = vmatpush.msra.mxu0 0.0
    %120 = vmatpush.msra.mxu0 0.0
    %121 = vmatpush.msra.mxu0 0.0
    %122 = vmatpush.msra.mxu0 0.0
    %123 = vmatpush.msra.mxu0 0.0
    %124 = vmatpush.msra.mxu0 0.0
    %125 = vmatpush.msra.mxu0 0.0
    %126 = vmatpush.msra.mxu0 0.0
    %127 = vmatpush.msra.mxu0 0.0
    %128 = vmatpush.msra.mxu0 0.0
    %129 = vmatpush.msra.mxu0 %v93
    %130 = vmatpush.msra.mxu0 %v92
    %131 = vmatpush.msra.mxu0 %v91
    %132 = vmatpush.msra.mxu0 %v90
    %133 = vmatmul.f32.gmra.mxu0 %v100
    %v134 = vpop.f32.mrf.mxu0
    %v135 = vadd.f32 %v96, %v134
    %136 = vmatmul.f32.gmra.mxu0 %v103
    %v137 = vpop.f32.mrf.mxu0
    %v138 = vadd.f32 %v96, %v137
    %139 = vmatmul.f32.gmra.mxu0 %v106
    %v140 = vpop.f32.mrf.mxu0
    %v141 = vadd.f32 %v96, %v140
    %142 = vmatmul.f32.gmra.mxu0 %v109
    %v143 = vpop.f32.mrf.mxu0
    %v144 = vadd.f32 %v96, %v143
    %145 = vmatmul.f32.gmra.mxu0 %v112
    %v146 = vpop.f32.mrf.mxu0
    %v147 = vadd.f32 %v96, %v146
    %148 = vmatmul.f32.gmra.mxu0 %v115
    %v149 = vpop.f32.mrf.mxu0
    %v150 = vadd.f32 %v96, %v149
    %151 = vdwg.mxu0
    %v152 = vlaneseq
    %v153 = vand.u32 %v152, 127
    %vm154 = vcmp.ge.s32.totalorder %v153, 0
    %vm155 = vcmp.lt.s32.totalorder %v153, 8
    %vm156 = vmand %vm154, %vm155
    %v157 = vsel %vm156, 1, 0
    %v158 = vcvt.s32.f32 %v157
    %160 = vrot.lane.b32.xlu0 %v158, 32
    %v161 = vpop.permute.xlu0 %160
    %v163 = vmul.f32 %v141, %v161
    %v164 = vmul.f32 %v144, %v161
    %165 = vrot.lane.b32.xlu0 %v158, 64
    %v166 = vpop.permute.xlu0 %165
    %v168 = vmul.f32 %v147, %v166
    %v169 = vmul.f32 %v150, %v166
    %171 = vrot.lane.b32.xlu0 %v163, 96
    %v172 = vpop.permute.xlu0 %171
    %v174 = vsel %vm98, %v135, 0
    %v176 = vsel %vm98, %v172, 0
    %178 = vmatpush.xpose.msra.mxu0 0.0
    %179 = vmatpush.xpose.msra.mxu0 0.0
    %180 = vmatpush.xpose.msra.mxu0 0.0
    %181 = vmatpush.xpose.msra.mxu0 0.0
    %182 = vmatpush.xpose.msra.mxu0 0.0
    %183 = vmatpush.xpose.msra.mxu0 0.0
    %184 = vmatpush.xpose.msra.mxu0 0.0
    %185 = vmatpush.xpose.msra.mxu0 0.0
    %186 = vmatpush.xpose.msra.mxu0 0.0
    %187 = vmatpush.xpose.msra.mxu0 0.0
    %188 = vmatpush.xpose.msra.mxu0 0.0
    %189 = vmatpush.xpose.msra.mxu0 0.0
    %190 = vmatpush.xpose.msra.mxu0 0.0
    %191 = vmatpush.xpose.msra.mxu0 0.0
    %192 = vmatpush.xpose.msra.mxu0 0.0
    %193 = vmatpush.xpose.msra.mxu0 %v176
    %194 = vmatmul.f32.gmra.mxu0 %v174
    %v195 = vpop.f32.mrf.mxu0
    %v196 = vadd.f32 0.0, %v195
    %197 = vdwg.mxu0
    %199 = vrot.lane.b32.xlu0 %v164, 96
    %v200 = vpop.permute.xlu0 %199
    %v202 = vsel %vm98, %v138, 0
    %v204 = vsel %vm98, %v200, 0
    %206 = vmatpush.xpose.msra.mxu0 0.0
    %207 = vmatpush.xpose.msra.mxu0 0.0
    %208 = vmatpush.xpose.msra.mxu0 0.0
    %209 = vmatpush.xpose.msra.mxu0 0.0
    %210 = vmatpush.xpose.msra.mxu0 0.0
    %211 = vmatpush.xpose.msra.mxu0 0.0
    %212 = vmatpush.xpose.msra.mxu0 0.0
    %213 = vmatpush.xpose.msra.mxu0 0.0
    %214 = vmatpush.xpose.msra.mxu0 0.0
    %215 = vmatpush.xpose.msra.mxu0 0.0
    %216 = vmatpush.xpose.msra.mxu0 0.0
    %217 = vmatpush.xpose.msra.mxu0 0.0
    %218 = vmatpush.xpose.msra.mxu0 0.0
    %219 = vmatpush.xpose.msra.mxu0 0.0
    %220 = vmatpush.xpose.msra.mxu0 0.0
    %221 = vmatpush.xpose.msra.mxu0 %v204
    %222 = vmatmul.f32.gmra.mxu0 %v202
    %v223 = vpop.f32.mrf.mxu0
    %v224 = vadd.f32 0.0, %v223
    %225 = vdwg.mxu0
    %vm226 = vcmask 64512
    %v227 = vsel %vm226, %v196, -inf
    %228 = vmax.xlane.f32.xlu0 %v227
    %v229 = vpop.xlane.xlu0 %228
    %v230 = vsel %vm226, %v224, -inf
    %231 = vmax.xlane.f32.xlu0 %v230
    %v232 = vpop.xlane.xlu0 %231
    %v233 = vsub.f32 %v196, %v229
    %v234 = vsub.f32 %v224, %v232
    %v235 = vmul.f32 %v233, 1.442695
    %v236 = vpow.pop %v235
    %v237 = vmul.f32 %v234, 1.442695
    %v238 = vpow.pop %v237
    %v239 = vsel %vm226, %v236, 0.0
    %240 = vadd.xlane.f32.xlu0 %v239
    %v241 = vpop.xlane.xlu0 %240
    %v242 = vsel %vm226, %v238, 0.0
    %243 = vadd.xlane.f32.xlu0 %v242
    %v244 = vpop.xlane.xlu0 %243
    %v245 = vrcp.pop %v241
    %v246 = vmul.f32 %v241, %v245
    %v247 = vsub.f32 1.0, %v246
    %v248 = vmul.f32 %v245, %v247
    %v249 = vadd.f32 %v245, %v248
    %vm250 = vweird.f32 %v241
    %vm251 = vweird.f32 %v245
    %vm252 = vmor %vm250, %vm251
    %v253 = vsel %vm252, %v245, %v249
    %v254 = vand.u32 2147483647, %v241
    %vm255 = vcmp.eq.f32.partialorder %v254, 8.507059e+37
    %v256 = vand.u32 %v241, 2147483648
    %v257 = vor.u32 1.1754944e-38, %v256
    %v258 = vsel %vm255, %v257, %v253
    %v259 = vmul.f32 %v236, %v258
    %v260 = vrcp.pop %v244
    %v261 = vmul.f32 %v244, %v260
    %v262 = vsub.f32 1.0, %v261
    %v263 = vmul.f32 %v260, %v262
    %v264 = vadd.f32 %v260, %v263
    %vm265 = vweird.f32 %v244
    %vm266 = vweird.f32 %v260
    %vm267 = vmor %vm265, %vm266
    %v268 = vsel %vm267, %v260, %v264
    %v269 = vand.u32 2147483647, %v244
    %vm270 = vcmp.eq.f32.partialorder %v269, 8.507059e+37
    %v271 = vand.u32 %v244, 2147483648
    %v272 = vor.u32 1.1754944e-38, %v271
    %v273 = vsel %vm270, %v272, %v268
    %v274 = vmul.f32 %v238, %v273
    %vm275 = vcmp.ge.s32.totalorder %v153, 8
    %vm276 = vcmp.lt.s32.totalorder %v153, 16
    %vm277 = vmand %vm275, %vm276
    %v278 = vsel %vm277, 1, 0
    %v279 = vcvt.s32.f32 %v278
    %281 = vrot.lane.b32.xlu0 %v279, 32
    %v282 = vpop.permute.xlu0 %281
    %v284 = vmul.f32 %v141, %v282
    %v285 = vmul.f32 %v144, %v282
    %286 = vrot.lane.b32.xlu0 %v279, 64
    %v287 = vpop.permute.xlu0 %286
    %v289 = vmul.f32 %v147, %v287
    %v290 = vmul.f32 %v150, %v287
    %292 = vrot.lane.b32.xlu0 %v284, 96
    %v293 = vpop.permute.xlu0 %292
    %v294 = vsel %vm98, %v293, 0
    %296 = vmatpush.xpose.msra.mxu0 0.0
    %297 = vmatpush.xpose.msra.mxu0 0.0
    %298 = vmatpush.xpose.msra.mxu0 0.0
    %299 = vmatpush.xpose.msra.mxu0 0.0
    %300 = vmatpush.xpose.msra.mxu0 0.0
    %301 = vmatpush.xpose.msra.mxu0 0.0
    %302 = vmatpush.xpose.msra.mxu0 0.0
    %303 = vmatpush.xpose.msra.mxu0 0.0
    %304 = vmatpush.xpose.msra.mxu0 0.0
    %305 = vmatpush.xpose.msra.mxu0 0.0
    %306 = vmatpush.xpose.msra.mxu0 0.0
    %307 = vmatpush.xpose.msra.mxu0 0.0
    %308 = vmatpush.xpose.msra.mxu0 0.0
    %309 = vmatpush.xpose.msra.mxu0 0.0
    %310 = vmatpush.xpose.msra.mxu0 0.0
    %311 = vmatpush.xpose.msra.mxu0 %v294
    %312 = vmatmul.f32.gmra.mxu0 %v174
    %v313 = vpop.f32.mrf.mxu0
    %v314 = vadd.f32 0.0, %v313
    %315 = vdwg.mxu0
    %317 = vrot.lane.b32.xlu0 %v285, 96
    %v318 = vpop.permute.xlu0 %317
    %v319 = vsel %vm98, %v318, 0
    %321 = vmatpush.xpose.msra.mxu0 0.0
    %322 = vmatpush.xpose.msra.mxu0 0.0
    %323 = vmatpush.xpose.msra.mxu0 0.0
    %324 = vmatpush.xpose.msra.mxu0 0.0
    %325 = vmatpush.xpose.msra.mxu0 0.0
    %326 = vmatpush.xpose.msra.mxu0 0.0
    %327 = vmatpush.xpose.msra.mxu0 0.0
    %328 = vmatpush.xpose.msra.mxu0 0.0
    %329 = vmatpush.xpose.msra.mxu0 0.0
    %330 = vmatpush.xpose.msra.mxu0 0.0
    %331 = vmatpush.xpose.msra.mxu0 0.0
    %332 = vmatpush.xpose.msra.mxu0 0.0
    %333 = vmatpush.xpose.msra.mxu0 0.0
    %334 = vmatpush.xpose.msra.mxu0 0.0
    %335 = vmatpush.xpose.msra.mxu0 0.0
    %336 = vmatpush.xpose.msra.mxu0 %v319
    %337 = vmatmul.f32.gmra.mxu0 %v202
    %v338 = vpop.f32.mrf.mxu0
    %v339 = vadd.f32 0.0, %v338
    %340 = vdwg.mxu0
    %v341 = vsel %vm226, %v314, -inf
    %342 = vmax.xlane.f32.xlu0 %v341
    %v343 = vpop.xlane.xlu0 %342
    %v344 = vsel %vm226, %v339, -inf
    %345 = vmax.xlane.f32.xlu0 %v344
    %v346 = vpop.xlane.xlu0 %345
    %v347 = vsub.f32 %v314, %v343
    %v348 = vsub.f32 %v339, %v346
    %v349 = vmul.f32 %v347, 1.442695
    %v350 = vpow.pop %v349
    %v351 = vmul.f32 %v348, 1.442695
    %v352 = vpow.pop %v351
    %v353 = vsel %vm226, %v350, 0.0
    %354 = vadd.xlane.f32.xlu0 %v353
    %v355 = vpop.xlane.xlu0 %354
    %v356 = vsel %vm226, %v352, 0.0
    %357 = vadd.xlane.f32.xlu0 %v356
    %v358 = vpop.xlane.xlu0 %357
    %v359 = vrcp.pop %v355
    %v360 = vmul.f32 %v355, %v359
    %v361 = vsub.f32 1.0, %v360
    %v362 = vmul.f32 %v359, %v361
    %v363 = vadd.f32 %v359, %v362
    %vm364 = vweird.f32 %v355
    %vm365 = vweird.f32 %v359
    %vm366 = vmor %vm364, %vm365
    %v367 = vsel %vm366, %v359, %v363
    %v368 = vand.u32 2147483647, %v355
    %vm369 = vcmp.eq.f32.partialorder %v368, 8.507059e+37
    %v370 = vand.u32 %v355, 2147483648
    %v371 = vor.u32 1.1754944e-38, %v370
    %v372 = vsel %vm369, %v371, %v367
    %v373 = vmul.f32 %v350, %v372
    %v374 = vrcp.pop %v358
    %v375 = vmul.f32 %v358, %v374
    %v376 = vsub.f32 1.0, %v375
    %v377 = vmul.f32 %v374, %v376
    %v378 = vadd.f32 %v374, %v377
    %vm379 = vweird.f32 %v358
    %vm380 = vweird.f32 %v374
    %vm381 = vmor %vm379, %vm380
    %v382 = vsel %vm381, %v374, %v378
    %v383 = vand.u32 2147483647, %v358
    %vm384 = vcmp.eq.f32.partialorder %v383, 8.507059e+37
    %v385 = vand.u32 %v358, 2147483648
    %v386 = vor.u32 1.1754944e-38, %v385
    %v387 = vsel %vm384, %v386, %v382
    %v388 = vmul.f32 %v352, %v387
    %390 = vrot.lane.b32.xlu0 %v289, 64
    %v391 = vpop.permute.xlu0 %390
    %v394 = vsel %vm226, %v373, 0
    %396 = vmatpush.msra.mxu0 0.0
    %397 = vmatpush.msra.mxu0 0.0
    %398 = vmatpush.msra.mxu0 0.0
    %399 = vmatpush.msra.mxu0 0.0
    %400 = vmatpush.msra.mxu0 0.0
    %401 = vmatpush.msra.mxu0 0.0
    %402 = vmatpush.msra.mxu0 0.0
    %403 = vmatpush.msra.mxu0 0.0
    %404 = vmatpush.msra.mxu0 0.0
    %405 = vmatpush.msra.mxu0 0.0
    %406 = vmatpush.msra.mxu0 0.0
    %407 = vmatpush.msra.mxu0 0.0
    %408 = vmatpush.msra.mxu0 0.0
    %409 = vmatpush.msra.mxu0 0.0
    %410 = vmatpush.msra.mxu0 0.0
    %411 = vmatpush.msra.mxu0 %v391
    %412 = vmatmul.f32.gmra.mxu0 %v394
    %v413 = vpop.f32.mrf.mxu0
    %v414 = vadd.f32 0.0, %v413
    %415 = vdwg.mxu0
    %417 = vrot.lane.b32.xlu0 %v290, 64
    %v418 = vpop.permute.xlu0 %417
    %v421 = vsel %vm226, %v388, 0
    %423 = vmatpush.msra.mxu0 0.0
    %424 = vmatpush.msra.mxu0 0.0
    %425 = vmatpush.msra.mxu0 0.0
    %426 = vmatpush.msra.mxu0 0.0
    %427 = vmatpush.msra.mxu0 0.0
    %428 = vmatpush.msra.mxu0 0.0
    %429 = vmatpush.msra.mxu0 0.0
    %430 = vmatpush.msra.mxu0 0.0
    %431 = vmatpush.msra.mxu0 0.0
    %432 = vmatpush.msra.mxu0 0.0
    %433 = vmatpush.msra.mxu0 0.0
    %434 = vmatpush.msra.mxu0 0.0
    %435 = vmatpush.msra.mxu0 0.0
    %436 = vmatpush.msra.mxu0 0.0
    %437 = vmatpush.msra.mxu0 0.0
    %438 = vmatpush.msra.mxu0 %v418
    %439 = vmatmul.f32.gmra.mxu0 %v421
    %v440 = vpop.f32.mrf.mxu0
    %v441 = vadd.f32 0.0, %v440
    %442 = vdwg.mxu0
    %444 = vrot.lane.b32.xlu0 %v168, 64
    %v445 = vpop.permute.xlu0 %444
    %v448 = vsel %vm226, %v259, 0
    %450 = vmatpush.msra.mxu0 0.0
    %451 = vmatpush.msra.mxu0 0.0
    %452 = vmatpush.msra.mxu0 0.0
    %453 = vmatpush.msra.mxu0 0.0
    %454 = vmatpush.msra.mxu0 0.0
    %455 = vmatpush.msra.mxu0 0.0
    %456 = vmatpush.msra.mxu0 0.0
    %457 = vmatpush.msra.mxu0 0.0
    %458 = vmatpush.msra.mxu0 0.0
    %459 = vmatpush.msra.mxu0 0.0
    %460 = vmatpush.msra.mxu0 0.0
    %461 = vmatpush.msra.mxu0 0.0
    %462 = vmatpush.msra.mxu0 0.0
    %463 = vmatpush.msra.mxu0 0.0
    %464 = vmatpush.msra.mxu0 0.0
    %465 = vmatpush.msra.mxu0 %v445
    %466 = vmatmul.f32.gmra.mxu0 %v448
    %v467 = vpop.f32.mrf.mxu0
    %v468 = vadd.f32 %v414, %v467
    %469 = vdwg.mxu0
    %471 = vrot.lane.b32.xlu0 %v169, 64
    %v472 = vpop.permute.xlu0 %471
    %v475 = vsel %vm226, %v274, 0
    %477 = vmatpush.msra.mxu0 0.0
    %478 = vmatpush.msra.mxu0 0.0
    %479 = vmatpush.msra.mxu0 0.0
    %480 = vmatpush.msra.mxu0 0.0
    %481 = vmatpush.msra.mxu0 0.0
    %482 = vmatpush.msra.mxu0 0.0
    %483 = vmatpush.msra.mxu0 0.0
    %484 = vmatpush.msra.mxu0 0.0
    %485 = vmatpush.msra.mxu0 0.0
    %486 = vmatpush.msra.mxu0 0.0
    %487 = vmatpush.msra.mxu0 0.0
    %488 = vmatpush.msra.mxu0 0.0
    %489 = vmatpush.msra.mxu0 0.0
    %490 = vmatpush.msra.mxu0 0.0
    %491 = vmatpush.msra.mxu0 0.0
    %492 = vmatpush.msra.mxu0 %v472
    %493 = vmatmul.f32.gmra.mxu0 %v475
    %v494 = vpop.f32.mrf.mxu0
    %v495 = vadd.f32 %v441, %v494
    %496 = vdwg.mxu0
    %vm497 = vcmp.ge.s32.totalorder %v153, 16
    %vm498 = vcmp.lt.s32.totalorder %v153, 24
    %vm499 = vmand %vm497, %vm498
    %v500 = vsel %vm499, 1, 0
    %v501 = vcvt.s32.f32 %v500
    %503 = vrot.lane.b32.xlu0 %v501, 32
    %v504 = vpop.permute.xlu0 %503
    %v506 = vmul.f32 %v141, %v504
    %v507 = vmul.f32 %v144, %v504
    %508 = vrot.lane.b32.xlu0 %v501, 64
    %v509 = vpop.permute.xlu0 %508
    %v511 = vmul.f32 %v147, %v509
    %v512 = vmul.f32 %v150, %v509
    %514 = vrot.lane.b32.xlu0 %v506, 96
    %v515 = vpop.permute.xlu0 %514
    %v516 = vsel %vm98, %v515, 0
    %518 = vmatpush.xpose.msra.mxu0 0.0
    %519 = vmatpush.xpose.msra.mxu0 0.0
    %520 = vmatpush.xpose.msra.mxu0 0.0
    %521 = vmatpush.xpose.msra.mxu0 0.0
    %522 = vmatpush.xpose.msra.mxu0 0.0
    %523 = vmatpush.xpose.msra.mxu0 0.0
    %524 = vmatpush.xpose.msra.mxu0 0.0
    %525 = vmatpush.xpose.msra.mxu0 0.0
    %526 = vmatpush.xpose.msra.mxu0 0.0
    %527 = vmatpush.xpose.msra.mxu0 0.0
    %528 = vmatpush.xpose.msra.mxu0 0.0
    %529 = vmatpush.xpose.msra.mxu0 0.0
    %530 = vmatpush.xpose.msra.mxu0 0.0
    %531 = vmatpush.xpose.msra.mxu0 0.0
    %532 = vmatpush.xpose.msra.mxu0 0.0
    %533 = vmatpush.xpose.msra.mxu0 %v516
    %534 = vmatmul.f32.gmra.mxu0 %v174
    %v535 = vpop.f32.mrf.mxu0
    %v536 = vadd.f32 0.0, %v535
    %537 = vdwg.mxu0
    %539 = vrot.lane.b32.xlu0 %v507, 96
    %v540 = vpop.permute.xlu0 %539
    %v541 = vsel %vm98, %v540, 0
    %543 = vmatpush.xpose.msra.mxu0 0.0
    %544 = vmatpush.xpose.msra.mxu0 0.0
    %545 = vmatpush.xpose.msra.mxu0 0.0
    %546 = vmatpush.xpose.msra.mxu0 0.0
    %547 = vmatpush.xpose.msra.mxu0 0.0
    %548 = vmatpush.xpose.msra.mxu0 0.0
    %549 = vmatpush.xpose.msra.mxu0 0.0
    %550 = vmatpush.xpose.msra.mxu0 0.0
    %551 = vmatpush.xpose.msra.mxu0 0.0
    %552 = vmatpush.xpose.msra.mxu0 0.0
    %553 = vmatpush.xpose.msra.mxu0 0.0
    %554 = vmatpush.xpose.msra.mxu0 0.0
    %555 = vmatpush.xpose.msra.mxu0 0.0
    %556 = vmatpush.xpose.msra.mxu0 0.0
    %557 = vmatpush.xpose.msra.mxu0 0.0
    %558 = vmatpush.xpose.msra.mxu0 %v541
    %559 = vmatmul.f32.gmra.mxu0 %v202
    %v560 = vpop.f32.mrf.mxu0
    %v561 = vadd.f32 0.0, %v560
    %562 = vdwg.mxu0
    %v563 = vsel %vm226, %v536, -inf
    %564 = vmax.xlane.f32.xlu0 %v563
    %v565 = vpop.xlane.xlu0 %564
    %v566 = vsel %vm226, %v561, -inf
    %567 = vmax.xlane.f32.xlu0 %v566
    %v568 = vpop.xlane.xlu0 %567
    %v569 = vsub.f32 %v536, %v565
    %v570 = vsub.f32 %v561, %v568
    %v571 = vmul.f32 %v569, 1.442695
    %v572 = vpow.pop %v571
    %v573 = vmul.f32 %v570, 1.442695
    %v574 = vpow.pop %v573
    %v575 = vsel %vm226, %v572, 0.0
    %576 = vadd.xlane.f32.xlu0 %v575
    %v577 = vpop.xlane.xlu0 %576
    %v578 = vsel %vm226, %v574, 0.0
    %579 = vadd.xlane.f32.xlu0 %v578
    %v580 = vpop.xlane.xlu0 %579
    %v581 = vrcp.pop %v577
    %v582 = vmul.f32 %v577, %v581
    %v583 = vsub.f32 1.0, %v582
    %v584 = vmul.f32 %v581, %v583
    %v585 = vadd.f32 %v581, %v584
    %vm586 = vweird.f32 %v577
    %vm587 = vweird.f32 %v581
    %vm588 = vmor %vm586, %vm587
    %v589 = vsel %vm588, %v581, %v585
    %v590 = vand.u32 2147483647, %v577
    %vm591 = vcmp.eq.f32.partialorder %v590, 8.507059e+37
    %v592 = vand.u32 %v577, 2147483648
    %v593 = vor.u32 1.1754944e-38, %v592
    %v594 = vsel %vm591, %v593, %v589
    %v595 = vmul.f32 %v572, %v594
    %v596 = vrcp.pop %v580
    %v597 = vmul.f32 %v580, %v596
    %v598 = vsub.f32 1.0, %v597
    %v599 = vmul.f32 %v596, %v598
    %v600 = vadd.f32 %v596, %v599
    %vm601 = vweird.f32 %v580
    %vm602 = vweird.f32 %v596
    %vm603 = vmor %vm601, %vm602
    %v604 = vsel %vm603, %v596, %v600
    %v605 = vand.u32 2147483647, %v580
    %vm606 = vcmp.eq.f32.partialorder %v605, 8.507059e+37
    %v607 = vand.u32 %v580, 2147483648
    %v608 = vor.u32 1.1754944e-38, %v607
    %v609 = vsel %vm606, %v608, %v604
    %v610 = vmul.f32 %v574, %v609
    %612 = vrot.lane.b32.xlu0 %v511, 64
    %v613 = vpop.permute.xlu0 %612
    %v616 = vsel %vm226, %v595, 0
    %618 = vmatpush.msra.mxu0 0.0
    %619 = vmatpush.msra.mxu0 0.0
    %620 = vmatpush.msra.mxu0 0.0
    %621 = vmatpush.msra.mxu0 0.0
    %622 = vmatpush.msra.mxu0 0.0
    %623 = vmatpush.msra.mxu0 0.0
    %624 = vmatpush.msra.mxu0 0.0
    %625 = vmatpush.msra.mxu0 0.0
    %626 = vmatpush.msra.mxu0 0.0
    %627 = vmatpush.msra.mxu0 0.0
    %628 = vmatpush.msra.mxu0 0.0
    %629 = vmatpush.msra.mxu0 0.0
    %630 = vmatpush.msra.mxu0 0.0
    %631 = vmatpush.msra.mxu0 0.0
    %632 = vmatpush.msra.mxu0 0.0
    %633 = vmatpush.msra.mxu0 %v613
    %634 = vmatmul.f32.gmra.mxu0 %v616
    %v635 = vpop.f32.mrf.mxu0
    %v636 = vadd.f32 0.0, %v635
    %637 = vdwg.mxu0
    %639 = vrot.lane.b32.xlu0 %v512, 64
    %v640 = vpop.permute.xlu0 %639
    %v643 = vsel %vm226, %v610, 0
    %645 = vmatpush.msra.mxu0 0.0
    %646 = vmatpush.msra.mxu0 0.0
    %647 = vmatpush.msra.mxu0 0.0
    %648 = vmatpush.msra.mxu0 0.0
    %649 = vmatpush.msra.mxu0 0.0
    %650 = vmatpush.msra.mxu0 0.0
    %651 = vmatpush.msra.mxu0 0.0
    %652 = vmatpush.msra.mxu0 0.0
    %653 = vmatpush.msra.mxu0 0.0
    %654 = vmatpush.msra.mxu0 0.0
    %655 = vmatpush.msra.mxu0 0.0
    %656 = vmatpush.msra.mxu0 0.0
    %657 = vmatpush.msra.mxu0 0.0
    %658 = vmatpush.msra.mxu0 0.0
    %659 = vmatpush.msra.mxu0 0.0
    %660 = vmatpush.msra.mxu0 %v640
    %661 = vmatmul.f32.gmra.mxu0 %v643
    %v662 = vpop.f32.mrf.mxu0
    %v663 = vadd.f32 0.0, %v662
    %664 = vdwg.mxu0
    %v665 = vadd.f32 %v468, %v636
    %v666 = vadd.f32 %v495, %v663
    %vm667 = vcmp.ge.s32.totalorder %v153, 24
    %vm668 = vcmp.lt.s32.totalorder %v153, 32
    %vm669 = vmand %vm667, %vm668
    %v670 = vsel %vm669, 1, 0
    %v671 = vcvt.s32.f32 %v670
    %673 = vrot.lane.b32.xlu0 %v671, 32
    %v674 = vpop.permute.xlu0 %673
    %v676 = vmul.f32 %v141, %v674
    %v677 = vmul.f32 %v144, %v674
    %678 = vrot.lane.b32.xlu0 %v671, 64
    %v679 = vpop.permute.xlu0 %678
    %v681 = vmul.f32 %v147, %v679
    %v682 = vmul.f32 %v150, %v679
    %684 = vrot.lane.b32.xlu0 %v676, 96
    %v685 = vpop.permute.xlu0 %684
    %v686 = vsel %vm98, %v685, 0
    %688 = vmatpush.xpose.msra.mxu0 0.0
    %689 = vmatpush.xpose.msra.mxu0 0.0
    %690 = vmatpush.xpose.msra.mxu0 0.0
    %691 = vmatpush.xpose.msra.mxu0 0.0
    %692 = vmatpush.xpose.msra.mxu0 0.0
    %693 = vmatpush.xpose.msra.mxu0 0.0
    %694 = vmatpush.xpose.msra.mxu0 0.0
    %695 = vmatpush.xpose.msra.mxu0 0.0
    %696 = vmatpush.xpose.msra.mxu0 0.0
    %697 = vmatpush.xpose.msra.mxu0 0.0
    %698 = vmatpush.xpose.msra.mxu0 0.0
    %699 = vmatpush.xpose.msra.mxu0 0.0
    %700 = vmatpush.xpose.msra.mxu0 0.0
    %701 = vmatpush.xpose.msra.mxu0 0.0
    %702 = vmatpush.xpose.msra.mxu0 0.0
    %703 = vmatpush.xpose.msra.mxu0 %v686
    %704 = vmatmul.f32.gmra.mxu0 %v174
    %v705 = vpop.f32.mrf.mxu0
    %v706 = vadd.f32 0.0, %v705
    %707 = vdwg.mxu0
    %709 = vrot.lane.b32.xlu0 %v677, 96
    %v710 = vpop.permute.xlu0 %709
    %v711 = vsel %vm98, %v710, 0
    %713 = vmatpush.xpose.msra.mxu0 0.0
    %714 = vmatpush.xpose.msra.mxu0 0.0
    %715 = vmatpush.xpose.msra.mxu0 0.0
    %716 = vmatpush.xpose.msra.mxu0 0.0
    %717 = vmatpush.xpose.msra.mxu0 0.0
    %718 = vmatpush.xpose.msra.mxu0 0.0
    %719 = vmatpush.xpose.msra.mxu0 0.0
    %720 = vmatpush.xpose.msra.mxu0 0.0
    %721 = vmatpush.xpose.msra.mxu0 0.0
    %722 = vmatpush.xpose.msra.mxu0 0.0
    %723 = vmatpush.xpose.msra.mxu0 0.0
    %724 = vmatpush.xpose.msra.mxu0 0.0
    %725 = vmatpush.xpose.msra.mxu0 0.0
    %726 = vmatpush.xpose.msra.mxu0 0.0
    %727 = vmatpush.xpose.msra.mxu0 0.0
    %728 = vmatpush.xpose.msra.mxu0 %v711
    %729 = vmatmul.f32.gmra.mxu0 %v202
    %v730 = vpop.f32.mrf.mxu0
    %v731 = vadd.f32 0.0, %v730
    %732 = vdwg.mxu0
    %v733 = vsel %vm226, %v706, -inf
    %734 = vmax.xlane.f32.xlu0 %v733
    %v735 = vpop.xlane.xlu0 %734
    %v736 = vsel %vm226, %v731, -inf
    %737 = vmax.xlane.f32.xlu0 %v736
    %v738 = vpop.xlane.xlu0 %737
    %v739 = vsub.f32 %v706, %v735
    %v740 = vsub.f32 %v731, %v738
    %v741 = vmul.f32 %v739, 1.442695
    %v742 = vpow.pop %v741
    %v743 = vmul.f32 %v740, 1.442695
    %v744 = vpow.pop %v743
    %v745 = vsel %vm226, %v742, 0.0
    %746 = vadd.xlane.f32.xlu0 %v745
    %v747 = vpop.xlane.xlu0 %746
    %v748 = vsel %vm226, %v744, 0.0
    %749 = vadd.xlane.f32.xlu0 %v748
    %v750 = vpop.xlane.xlu0 %749
    %v751 = vrcp.pop %v747
    %v752 = vmul.f32 %v747, %v751
    %v753 = vsub.f32 1.0, %v752
    %v754 = vmul.f32 %v751, %v753
    %v755 = vadd.f32 %v751, %v754
    %vm756 = vweird.f32 %v747
    %vm757 = vweird.f32 %v751
    %vm758 = vmor %vm756, %vm757
    %v759 = vsel %vm758, %v751, %v755
    %v760 = vand.u32 2147483647, %v747
    %vm761 = vcmp.eq.f32.partialorder %v760, 8.507059e+37
    %v762 = vand.u32 %v747, 2147483648
    %v763 = vor.u32 1.1754944e-38, %v762
    %v764 = vsel %vm761, %v763, %v759
    %v765 = vmul.f32 %v742, %v764
    %v766 = vrcp.pop %v750
    %v767 = vmul.f32 %v750, %v766
    %v768 = vsub.f32 1.0, %v767
    %v769 = vmul.f32 %v766, %v768
    %v770 = vadd.f32 %v766, %v769
    %vm771 = vweird.f32 %v750
    %vm772 = vweird.f32 %v766
    %vm773 = vmor %vm771, %vm772
    %v774 = vsel %vm773, %v766, %v770
    %v775 = vand.u32 2147483647, %v750
    %vm776 = vcmp.eq.f32.partialorder %v775, 8.507059e+37
    %v777 = vand.u32 %v750, 2147483648
    %v778 = vor.u32 1.1754944e-38, %v777
    %v779 = vsel %vm776, %v778, %v774
    %v780 = vmul.f32 %v744, %v779
    %782 = vrot.lane.b32.xlu0 %v681, 64
    %v783 = vpop.permute.xlu0 %782
    %v786 = vsel %vm226, %v765, 0
    %788 = vmatpush.msra.mxu0 0.0
    %789 = vmatpush.msra.mxu0 0.0
    %790 = vmatpush.msra.mxu0 0.0
    %791 = vmatpush.msra.mxu0 0.0
    %792 = vmatpush.msra.mxu0 0.0
    %793 = vmatpush.msra.mxu0 0.0
    %794 = vmatpush.msra.mxu0 0.0
    %795 = vmatpush.msra.mxu0 0.0
    %796 = vmatpush.msra.mxu0 0.0
    %797 = vmatpush.msra.mxu0 0.0
    %798 = vmatpush.msra.mxu0 0.0
    %799 = vmatpush.msra.mxu0 0.0
    %800 = vmatpush.msra.mxu0 0.0
    %801 = vmatpush.msra.mxu0 0.0
    %802 = vmatpush.msra.mxu0 0.0
    %803 = vmatpush.msra.mxu0 %v783
    %804 = vmatmul.f32.gmra.mxu0 %v786
    %v805 = vpop.f32.mrf.mxu0
    %v806 = vadd.f32 0.0, %v805
    %807 = vdwg.mxu0
    %809 = vrot.lane.b32.xlu0 %v682, 64
    %v810 = vpop.permute.xlu0 %809
    %v813 = vsel %vm226, %v780, 0
    %815 = vmatpush.msra.mxu0 0.0
    %816 = vmatpush.msra.mxu0 0.0
    %817 = vmatpush.msra.mxu0 0.0
    %818 = vmatpush.msra.mxu0 0.0
    %819 = vmatpush.msra.mxu0 0.0
    %820 = vmatpush.msra.mxu0 0.0
    %821 = vmatpush.msra.mxu0 0.0
    %822 = vmatpush.msra.mxu0 0.0
    %823 = vmatpush.msra.mxu0 0.0
    %824 = vmatpush.msra.mxu0 0.0
    %825 = vmatpush.msra.mxu0 0.0
    %826 = vmatpush.msra.mxu0 0.0
    %827 = vmatpush.msra.mxu0 0.0
    %828 = vmatpush.msra.mxu0 0.0
    %829 = vmatpush.msra.mxu0 0.0
    %830 = vmatpush.msra.mxu0 %v810
    %831 = vmatmul.f32.gmra.mxu0 %v813
    %v832 = vpop.f32.mrf.mxu0
    %v833 = vadd.f32 0.0, %v832
    %834 = vdwg.mxu0
    %v835 = vadd.f32 %v665, %v806
    %v836 = vadd.f32 %v666, %v833
    %837 = vst.msk [vmem:[#allocation10] sm:$0xff] %vm98, %v835
    %838 = vst.msk [vmem:[#allocation10 + $0x8] sm:$0xff] %vm98, %v836
    // Predicated region
    $region38: #{tpu_custom_call.1} parent=1 // pred_check
      _
    $region39: #{tpu_custom_call.1} parent=1 // pred_check_branch
      %840 = sbr.rel (0) target = $region41
    $region40: #{tpu_custom_call.1} parent=1 // pred_region
      %842 = vsyncadd [#allocation4], 0
      %s843 = sshll.u32 [#allocation10], 4
      %s844 = int_to_ptr.vmem [resolvable:$true] %s843
      %s845 = sshll.u32 %s5, 4
      %s846 = int_to_ptr.hbm [resolvable:$true] %s845
      %851 = dma.vmem_to_hbm [thread:$0]  %s844, 256, %s846, [#allocation4], 128, 128, 8
    $region41: #{tpu_custom_call.1} parent=1 // pred_fallthru
      _
    // Predicated region
    $region42: #{tpu_custom_call.1} parent=1 // pred_check
      _
    $region43: #{tpu_custom_call.1} parent=1 // pred_check_branch
      %853 = sbr.rel (0) target = $region45
    $region44: #{tpu_custom_call.1} parent=1 // pred_region
      %855 = dma.done [#allocation4], 256
    $region45: #{tpu_custom_call.1} parent=1 // pred_fallthru
      _
    %856 = vsyncpa [#allocation3], 1
    %857 = vsyncpa [#allocation6], 1
    %858 = vsyncpa [#allocation9], 1
    %859 = vsyncpa [#allocation4], 1

</llo_original>
